<compile_context>
chip_gen: v7x
topology: tpu7x:2x2x1
jax: 0.10.0
libtpu: 0.0.40
codegen_flags: <defaults>
</compile_context>

<pallas_src>
import jax
import jax.numpy as jnp
from jax.experimental import pallas as pl
from jax.experimental.pallas import tpu as pltpu


def _round_up(x, m):
    return ((x + m - 1) // m) * m


def _vmem_budget():
    """(bytes we plan to allocate, scoped vmem limit to request), per generation."""
    try:
        phys = int(pltpu.get_tpu_info().vmem_capacity_bytes)
    except Exception:
        phys = 64 * 1024 * 1024  # v7x per-TC VMEM: the most conservative default
    limit = min(int(phys * 0.8), 100 * 1024 * 1024)
    budget = limit - 2 * 1024 * 1024  # headroom for Mosaic internal scratch
    return budget, limit


def _step_kernel(x_ref, w_ref, b_ref, o_ref):
    # x: (tm, Cin) compute dtype; w: (Cin, Cout) compute dtype (pre-transposed
    # in the wrapper -> native MXU contraction, no in-kernel transpose);
    # b: (1, Cout) f32; o: (tm, Cout).
    y = jnp.dot(x_ref[...], w_ref[...], preferred_element_type=jnp.float32)
    o_ref[...] = jnp.maximum(y + b_ref[...], 0.0).astype(o_ref.dtype)


def _step_kernel_ktiled(x_ref, w_ref, b_ref, o_ref, acc_ref):
    # Large-C path: K (contraction) grid axis with an f32 accumulator.
    k = pl.program_id(1)

    @pl.when(k == 0)
    def _():
        acc_ref[...] = jnp.zeros_like(acc_ref)

    acc_ref[...] += jnp.dot(x_ref[...], w_ref[...],
                            preferred_element_type=jnp.float32)

    @pl.when(k == pl.num_programs(1) - 1)
    def _():
        o_ref[...] = jnp.maximum(acc_ref[...] + b_ref[...], 0.0).astype(o_ref.dtype)


def step_layer(x, weight, bias, *, compute_dtype=jnp.bfloat16,
               out_dtype=jnp.float32):
    """relu(x @ weight.T + bias); x: (..., C), weight: (C, C) PyTorch layout."""
    *lead, C = x.shape
    assert weight.shape == (C, C) and bias.shape == (C,)
    x2 = x.reshape(-1, C)
    N = x2.shape[0]

    itemsize = jnp.dtype(compute_dtype).itemsize
    row_align = max(32 // itemsize, 8)  # f32 -> 8, bf16 -> 16 (sublane packing)
    budget, vmem_limit = _vmem_budget()

    # Pad the feature/contraction dim only when it pays off (lane-dense stores
    # for large C) or is required (K tiling).  Tiny / 128-aligned C: no pad at
    # all, block == full array dim is legal.
    if C % 128 == 0 or C <= 128:
        c_dim, pad_c = C, 0
    else:
        c_dim = _round_up(C, 128)
        pad_c = c_dim - C

    x_c = x2.astype(compute_dtype)
    w_t = weight.T.astype(compute_dtype)          # (in, out), one-time transpose
    b_r = bias.astype(jnp.float32).reshape(1, C)

    # Resident-weight sizing (weight/bias counted double-buffered = worst case).
    resident = 2 * (c_dim * c_dim * itemsize + c_dim * 4)
    per_row = 2 * c_dim * itemsize + 2 * c_dim * 4    # x tiles + f32 out tiles
    avail = budget - resident

    if avail >= per_row * 128:
        # ---------------- Path A: VMEM-resident weight, grid over N ----------
        if pad_c:
            x_c = jnp.pad(x_c, ((0, 0), (0, pad_c)))
            w_t = jnp.pad(w_t, ((0, pad_c), (0, pad_c)))
            b_r = jnp.pad(b_r, ((0, 0), (0, pad_c)))

        tm = min(avail // per_row, 2048)
        if N > 256:  # keep >= 2 grid steps for v7x's 2 TCs / pipeline depth
            tm = min(tm, _round_up(pl.cdiv(N, 2), 256))
        tm = min(tm, _round_up(N, row_align))         # don't tile past the data
        for align in (256, 128, row_align):
            if tm >= align:
                tm = (tm // align) * align
                break
        tm = max(int(tm), row_align)

        grid = (pl.cdiv(N, tm),)  # ragged last block: OOB rows masked on store
        out = pl.pallas_call(
            _step_kernel,
            out_shape=jax.ShapeDtypeStruct((N, c_dim), out_dtype),
            grid_spec=pltpu.PrefetchScalarGridSpec(
                num_scalar_prefetch=0,
                grid=grid,
                in_specs=[
                    pl.BlockSpec((tm, c_dim), lambda i: (i, 0)),     # x: tiled
                    pl.BlockSpec((c_dim, c_dim), lambda i: (0, 0)),  # W: resident
                    pl.BlockSpec((1, c_dim), lambda i: (0, 0)),      # b: resident
                ],
                out_specs=pl.BlockSpec((tm, c_dim), lambda i: (i, 0)),
            ),
            compiler_params=pltpu.CompilerParams(
                dimension_semantics=("parallel",),
                vmem_limit_bytes=vmem_limit,
            ),
        )(x_c, w_t, b_r)
    else:
        # ---------------- Path B: weight too big for VMEM, tile K ------------
        c_out = _round_up(C, 128)
        tm = tk = None
        for tm_try in (512, 256, 128):
            fixed = 12 * tm_try * c_out + 8 * c_out   # out(x2) + f32 acc + bias
            tk_try = (budget - fixed) // (2 * itemsize * (tm_try + c_out))
            tk_try = (tk_try // 128) * 128
            if tk_try >= 128:
                tm, tk = tm_try, int(tk_try)
                break
        if tm is None:
            # TODO(synk): tile the output-column dim as well for enormous C.
            raise NotImplementedError("C too large for single-column-tile kernel")
        tk = min(tk, _round_up(C, 128))
        c_in = _round_up(C, tk)                       # zero-pad K to a tile multiple

        x_c = jnp.pad(x_c, ((0, 0), (0, c_in - C)))
        w_t = jnp.pad(w_t, ((0, c_in - C), (0, c_out - C)))
        b_r = jnp.pad(b_r, ((0, 0), (0, c_out - C)))

        grid = (pl.cdiv(N, tm), c_in // tk)           # reduction axis last
        out = pl.pallas_call(
            _step_kernel_ktiled,
            out_shape=jax.ShapeDtypeStruct((N, c_out), out_dtype),
            grid_spec=pltpu.PrefetchScalarGridSpec(
                num_scalar_prefetch=0,
                grid=grid,
                in_specs=[
                    pl.BlockSpec((tm, tk), lambda m, k: (m, k)),
                    pl.BlockSpec((tk, c_out), lambda m, k: (k, 0)),
                    pl.BlockSpec((1, c_out), lambda m, k: (0, 0)),
                ],
                out_specs=pl.BlockSpec((tm, c_out), lambda m, k: (m, 0)),
                scratch_shapes=[pltpu.VMEM((tm, c_out), jnp.float32)],
            ),
            compiler_params=pltpu.CompilerParams(
                dimension_semantics=("parallel", "arbitrary"),
                vmem_limit_bytes=vmem_limit,
            ),
        )(x_c, w_t, b_r)
        pad_c = c_out - C

    if pad_c:
        out = out[:, :C]
    return out.reshape(*lead, C)


if __name__ == "__main__":
    key = jax.random.PRNGKey(0)
    kx, kw, kb = jax.random.split(key, 3)

    N, C = 16, 32  # small shapes: batch=16, channels=32
    x = jax.random.normal(kx, (N, C), dtype=jnp.float32)
    # Deterministic params mimicking nn.Linear's uniform(-1/sqrt(C), 1/sqrt(C)).
    bound = 1.0 / (C ** 0.5)
    weight = jax.random.uniform(kw, (C, C), minval=-bound, maxval=bound,
                                dtype=jnp.float32)
    bias = jax.random.uniform(kb, (C,), minval=-bound, maxval=bound,
                              dtype=jnp.float32)

    out = jax.block_until_ready(step_layer(x, weight, bias))

    # Tight check vs. a reference that uses the same bf16 input/weight rounding
    # (f32 accumulate), plus a loose sanity check vs. pure-f32 semantics.
    xb = x.astype(jnp.bfloat16).astype(jnp.float32)
    wb = weight.astype(jnp.bfloat16).astype(jnp.float32)
    ref_bf16 = jnp.maximum(xb @ wb.T + bias, 0.0)
    ref_f32 = jnp.maximum(x @ weight.T + bias, 0.0)

    assert out.shape == (N, C) and out.dtype == jnp.float32
    assert jnp.allclose(out, ref_bf16, atol=1e-4, rtol=1e-4)
    assert jnp.allclose(out, ref_f32, atol=1e-1, rtol=5e-2)
    print("KERNEL_OK")
</pallas_src>

<mosaic_0001>
module attributes {stable_mosaic.version = 11 : i64} {
  func.func @_step_kernel(%arg0: i32, %arg1: memref<16x32xbf16, #tpu.memory_space<vmem>>, %arg2: memref<32x32xbf16, #tpu.memory_space<vmem>>, %arg3: memref<1x32xf32, #tpu.memory_space<vmem>>, %arg4: memref<16x32xf32, #tpu.memory_space<vmem>>) attributes {dimension_semantics = [#tpu.dimension_semantics<parallel>], iteration_bounds = array<i64: 1>, scalar_prefetch = 0 : i64, scratch_operands = 0 : i64, tpu.core_type = #tpu.core_type<tc>, window_params = [{transform_indices = @transform_0, window_bounds = array<i64: 16, 32>}, {pipeline_mode = #tpu.pipeline_mode<synchronous>, transform_indices = @transform_1, window_bounds = array<i64: 32, 32>}, {pipeline_mode = #tpu.pipeline_mode<synchronous>, transform_indices = @transform_2, window_bounds = array<i64: 1, 32>}, {transform_indices = @transform_3, window_bounds = array<i64: 16, 32>}]} {
    %c0 = arith.constant 0 : index
    %c0_0 = arith.constant 0 : index
    %0 = vector.load %arg1[%c0, %c0_0] : memref<16x32xbf16, #tpu.memory_space<vmem>>, vector<16x32xbf16>
    %c0_1 = arith.constant 0 : index
    %c0_2 = arith.constant 0 : index
    %1 = vector.load %arg2[%c0_1, %c0_2] : memref<32x32xbf16, #tpu.memory_space<vmem>>, vector<32x32xbf16>
    %cst = arith.constant dense<0.000000e+00> : vector<16x32xf32>
    %2 = tpu.matmul %0, %1, %cst {dimension_numbers = #tpu.dot_dimension_numbers<[1], [0], [0], [1], [0, 0, 1, 1], [], []>} : vector<16x32xbf16>, vector<32x32xbf16>, vector<16x32xf32> -> vector<16x32xf32>
    %c0_3 = arith.constant 0 : index
    %c0_4 = arith.constant 0 : index
    %3 = vector.load %arg3[%c0_3, %c0_4] : memref<1x32xf32, #tpu.memory_space<vmem>>, vector<1x32xf32>
    %4 = vector.broadcast %3 : vector<1x32xf32> to vector<16x32xf32>
    %5 = arith.addf %2, %4 : vector<16x32xf32>
    %cst_5 = arith.constant 0.000000e+00 : f32
    %6 = vector.broadcast %cst_5 : f32 to vector<16x32xf32>
    %7 = arith.maximumf %5, %6 : vector<16x32xf32>
    %c0_6 = arith.constant 0 : index
    %c0_7 = arith.constant 0 : index
    %8 = vector.load %arg4[%c0_6, %c0_7] : memref<16x32xf32, #tpu.memory_space<vmem>>, vector<16x32xf32>
    tpu.vector_store %arg4[%c0_6, %c0_7], %7 {strides = array<i32>} : memref<16x32xf32, #tpu.memory_space<vmem>>, vector<16x32xf32>,
    return
  }
  func.func @transform_0(%arg0: i32) -> (i32, i32) {
    %c0_i32 = arith.constant 0 : i32
    %c0_i32_0 = arith.constant 0 : i32
    return %arg0, %c0_i32 : i32, i32
  }
  func.func @transform_1(%arg0: i32) -> (i32, i32) {
    %c0_i32 = arith.constant 0 : i32
    %c0_i32_0 = arith.constant 0 : i32
    %c0_i32_1 = arith.constant 0 : i32
    return %c0_i32, %c0_i32_0 : i32, i32
  }
  func.func @transform_2(%arg0: i32) -> (i32, i32) {
    %c0_i32 = arith.constant 0 : i32
    %c0_i32_0 = arith.constant 0 : i32
    %c0_i32_1 = arith.constant 0 : i32
    return %c0_i32, %c0_i32_0 : i32, i32
  }
  func.func @transform_3(%arg0: i32) -> (i32, i32) {
    %c0_i32 = arith.constant 0 : i32
    %c0_i32_0 = arith.constant 0 : i32
    return %arg0, %c0_i32 : i32, i32
  }
}

</mosaic_0001>

<llo_original>
// kernel: tpu_custom_call.1
$region0: #{tpu_custom_call.1}
  #allocation0 [shape = 'u32[]', space=smem, size = 0x4, offset = 0x4, fixed_abs, tag = 'smem constant byte address 0x4 - core index']
  #allocation1 [shape = 'u32[144,128]{1,0:T(1,128)}', space=vmem, size = 0x12000, scoped, tag = 'internal scratch']
  %s0 = inlined_call_operand.hbm [shape: bf16[16,32], index: 0, kind: input, shape index: {}]
  %s1 = inlined_call_operand.hbm [shape: bf16[32,32], index: 1, kind: input, shape index: {}]
  %s2 = inlined_call_operand.vmem [shape: f32[1,32], index: 2, kind: input, shape index: {}]
  %s3 = inlined_call_operand.hbm [shape: f32[16,32], index: 3, kind: output, shape index: {}]
  %s4 = sld [smem:[#allocation0]]
  $region30: #{tpu_custom_call.1} parent=0
    _
  %s6 = ssub.s32 1, %s4
  %s7 = scalar_select 0, %s6, %s4
  $region1: #{tpu_custom_call.1} parent=0
    #allocation2 [shape = 'u8[4096]{0}', space=vmem, size = 0x1000, scoped, tag = 'input window, operand 0, single buffered']
    #allocation3 [shape = 's32[1]{0}', space=sflag, size = 0x4, scoped, tag = 'scoped memory for tpu_custom_call.1']
    #allocation4 [shape = 's32[1]{0}', space=sflag, size = 0x4, scoped, tag = 'scoped memory for tpu_custom_call.1']
    #allocation5 [shape = 'u8[8192]{0}', space=vmem, size = 0x2000, scoped, tag = 'input window, operand 1, single buffered']
    #allocation6 [shape = 's32[1]{0}', space=sflag, size = 0x4, scoped, tag = 'scoped memory for tpu_custom_call.1']
    #allocation7 [shape = 'u8[8192]{0}', space=vmem, size = 0x2000, scoped, tag = 'output window, operand 0, single buffered']
    %8 = vsyncpa [#allocation3], 0
    %9 = vsyncpa [#allocation6], 0
    %10 = vsyncpa [#allocation4], 0
    // Predicated region
    $region2: #{tpu_custom_call.1} parent=1 // pred_check
      _
    $region3: #{tpu_custom_call.1} parent=1 // pred_check_branch
      %12 = sbr.rel (0) target = $region5
    $region4: #{tpu_custom_call.1} parent=1 // pred_region
      %s14 = ssub.s32 128, 128
      %15 = vsyncadd [#allocation3], %s14
      %s16 = sshll.u32 [#allocation2], 4
      %s17 = int_to_ptr.vmem [resolvable:$true] %s16
      %22 = dma.hbm_to_vmem [thread:$0]  %s0, 128, %s17, [#allocation3], 64, 64, 4
    $region5: #{tpu_custom_call.1} parent=1 // pred_fallthru
      _
    // Predicated region
    $region6: #{tpu_custom_call.1} parent=1 // pred_check
      _
    $region7: #{tpu_custom_call.1} parent=1 // pred_check_branch
      %24 = sbr.rel (0) target = $region9
    $region8: #{tpu_custom_call.1} parent=1 // pred_region
      %s26 = ssub.s32 256, 256
      %27 = vsyncadd [#allocation6], %s26
      %s28 = sshll.u32 [#allocation5], 4
      %s29 = int_to_ptr.vmem [resolvable:$true] %s28
      %34 = dma.hbm_to_vmem [thread:$0]  %s1, 256, %s29, [#allocation6], 64, 64, 4
    $region9: #{tpu_custom_call.1} parent=1 // pred_fallthru
      _
    // Predicated region
    $region10: #{tpu_custom_call.1} parent=1 // pred_check
      _
    $region11: #{tpu_custom_call.1} parent=1 // pred_check_branch
      %36 = sbr.rel (0) target = $region13
    $region12: #{tpu_custom_call.1} parent=1 // pred_region
      _
    $region13: #{tpu_custom_call.1} parent=1 // pred_fallthru
      _
    // Predicated region
    $region14: #{tpu_custom_call.1} parent=1 // pred_check
      _
    $region15: #{tpu_custom_call.1} parent=1 // pred_check_branch
      %38 = sbr.rel (0) target = $region17
    $region16: #{tpu_custom_call.1} parent=1 // pred_region
      %39 = dma.done [#allocation3], 128
    $region17: #{tpu_custom_call.1} parent=1 // pred_fallthru
      _
    // Predicated region
    $region18: #{tpu_custom_call.1} parent=1 // pred_check
      _
    $region19: #{tpu_custom_call.1} parent=1 // pred_check_branch
      %41 = sbr.rel (0) target = $region21
    $region20: #{tpu_custom_call.1} parent=1 // pred_region
      %42 = dma.done [#allocation6], 256
    $region21: #{tpu_custom_call.1} parent=1 // pred_fallthru
      _
    %v44 = vld [vmem:[#allocation2] sm:$0xf]
    %v45 = vld [vmem:[#allocation2 + $0x4] sm:$0xf]
    %v46 = vld [vmem:[#allocation5] sm:$0xf]
    %v47 = vld [vmem:[#allocation5 + $0x4] sm:$0xf]
    %v48 = vld [vmem:[#allocation5 + $0x8] sm:$0xf]
    %v49 = vld [vmem:[#allocation5 + $0xc] sm:$0xf]
    %v50 = vld [vmem:[%s2] sm:$0x1]
    %v52 = vlaneseq
    %v53 = vshrl.u32 %v52, 7
    %v54 = vsub.s32 0, %v53
    %v55 = vrot.slane %v50, %v54
    %v59 = vunpack.c.l.b16 %v44
    %v60 = vunpack.c.l.b16 %v45
    %v61 = vpack.c.b16 %v60, %v59
    %v66 = vunpack.c.l.b16 %v46
    %v67 = vunpack.c.l.b16 %v47
    %v68 = vunpack.c.l.b16 %v48
    %v69 = vunpack.c.l.b16 %v49
    %v70 = vpack.c.b16 %v67, %v66
    %v71 = vpack.c.b16 %v69, %v68
    %vm74 = vcmask 261120
    %v76 = vsel %vm74, %v61, 0
    %78 = vmatprep.subr.bf16.mxu0 0
    %79 = vmatpush1.bf16.msra.mxu0 %v70
    %80 = vmatprep.subr.bf16.mxu0 0
    %81 = vmatpush1.bf16.msra.mxu0 %v71
    %82 = vmatprep.subr.bf16.mxu0 0
    %83 = vmatpush1.bf16.msra.mxu0 0
    %84 = vmatprep.subr.bf16.mxu0 0
    %85 = vmatpush1.bf16.msra.mxu0 0
    %86 = vmatprep.subr.bf16.mxu0 0
    %87 = vmatpush1.bf16.msra.mxu0 0
    %88 = vmatprep.subr.bf16.mxu0 0
    %89 = vmatpush1.bf16.msra.mxu0 0
    %90 = vmatprep.subr.bf16.mxu0 0
    %91 = vmatpush1.bf16.msra.mxu0 0
    %92 = vmatprep.subr.bf16.mxu0 0
    %93 = vmatpush1.bf16.msra.mxu0 0
    %94 = vmatprep.subr.bf16.mxu0 0
    %95 = vmatpush1.bf16.msra.mxu0 0
    %96 = vmatprep.subr.bf16.mxu0 0
    %97 = vmatpush1.bf16.msra.mxu0 0
    %98 = vmatprep.subr.bf16.mxu0 0
    %99 = vmatpush1.bf16.msra.mxu0 0
    %100 = vmatprep.subr.bf16.mxu0 0
    %101 = vmatpush1.bf16.msra.mxu0 0
    %102 = vmatprep.subr.bf16.mxu0 0
    %103 = vmatpush1.bf16.msra.mxu0 0
    %104 = vmatprep.subr.bf16.mxu0 0
    %105 = vmatpush1.bf16.msra.mxu0 0
    %106 = vmatprep.subr.bf16.mxu0 0
    %107 = vmatpush1.bf16.msra.mxu0 0
    %108 = vmatprep.subr.bf16.mxu0 0
    %109 = vmatpush1.bf16.msra.mxu0 0
    %110 = vmatprep.mubr.bf16.mxu0 0
    %111 = vmatmul.mubr.bf16.gmra.mrb[0].mxu0 %v76
    %v112 = vpop.f32.mrb[0].mxu0
    %v113 = vadd.f32 %v55, %v112
    %v114 = vpop.f32.mrb[0].mxu0
    %v115 = vpop.f32.mrb[0].mxu0
    %v116 = vadd.f32 %v55, %v115
    %v117 = vpop.f32.mrb[0].mxu0
    %118 = vdwg.mxu0
    %v119 = vmax.f32 %v113, 0.0
    %v120 = vmax.f32 %v116, 0.0
    %121 = vst.msk [vmem:[#allocation7] sm:$0xff] %vm74, %v119
    %122 = vst.msk [vmem:[#allocation7 + $0x8] sm:$0xff] %vm74, %v120
    // Predicated region
    $region22: #{tpu_custom_call.1} parent=1 // pred_check
      _
    $region23: #{tpu_custom_call.1} parent=1 // pred_check_branch
      %124 = sbr.rel (0) target = $region25
    $region24: #{tpu_custom_call.1} parent=1 // pred_region
      %s126 = ssub.s32 256, 256
      %127 = vsyncadd [#allocation4], %s126
      %s128 = sshll.u32 [#allocation7], 4
      %s129 = int_to_ptr.vmem [resolvable:$true] %s128
      %134 = dma.vmem_to_hbm [thread:$0]  %s129, 256, %s3, [#allocation4], 128, 128, 8
    $region25: #{tpu_custom_call.1} parent=1 // pred_fallthru
      _
    // Predicated region
    $region26: #{tpu_custom_call.1} parent=1 // pred_check
      _
    $region27: #{tpu_custom_call.1} parent=1 // pred_check_branch
      %136 = sbr.rel (0) target = $region29
    $region28: #{tpu_custom_call.1} parent=1 // pred_region
      %137 = dma.done [#allocation4], 256
    $region29: #{tpu_custom_call.1} parent=1 // pred_fallthru
      _
    %138 = vsyncpa [#allocation3], 1
    %139 = vsyncpa [#allocation6], 1
    %140 = vsyncpa [#allocation4], 1

</llo_original>
